<compile_context>
chip_gen: v7x
topology: tpu7x:2x2x1
jax: 0.10.0
libtpu: 0.0.40
codegen_flags: <defaults>
</compile_context>

<pallas_src>
import functools

import jax
import jax.numpy as jnp
from jax import lax
from jax.experimental import pallas as pl
from jax.experimental.pallas import tpu as pltpu

SUB = 8                      # sublanes per vreg tile
LANE = 128                   # lanes per vreg tile
CHUNK_ROWS = 32              # rows per inner-loop step (4 vregs/input, bounded live set)
MAX_BLOCK_ROWS = 8192        # (8192,128) f32 block = 4 MiB; 2 inputs x 2 buffers = 16 MiB
VMEM_LIMIT_BYTES = 32 * 1024 * 1024   # raises v5e's 16 MiB default; == v6e/v7x default


def _chunk_sums(xc, tc):
    """(r, 128) chunk -> three (8, 128) partial sums: x*t, x+t, bce_pos."""
    xc = xc.astype(jnp.float32)
    tc = tc.astype(jnp.float32)
    r = xc.shape[0]
    # torch.nn.functional.binary_cross_entropy clamps log terms at -100.
    log_x = jnp.maximum(jnp.log(xc), -100.0)
    log_1mx = jnp.maximum(jnp.log(1.0 - xc), -100.0)
    bce_pos = tc * (log_x - log_1mx) + log_1mx   # = -(per-element BCE)

    def fold(v):
        # (r, 128) -> (8, 128): pure vreg adds on the VPU; the expensive
        # cross-lane reduction is deferred to the wrapper epilogue.
        return v.reshape(r // SUB, SUB, LANE).sum(axis=0)

    return fold(xc * tc), fold(xc + tc), fold(bce_pos)


def _block_sums(x_ref, t_ref, nrows):
    """Single fused pass over the first `nrows` (static) rows of the block."""
    nfull = nrows // CHUNK_ROWS
    rem = nrows % CHUNK_ROWS            # multiple of SUB (nrows, CHUNK_ROWS both are)

    zero = jnp.zeros((SUB, LANE), jnp.float32)
    a0, a1, a2 = zero, zero, zero

    if nfull > 0:
        def body(j, carry):
            c0, c1, c2 = carry
            off = pl.multiple_of(j * CHUNK_ROWS, CHUNK_ROWS)
            s0, s1, s2 = _chunk_sums(x_ref[pl.ds(off, CHUNK_ROWS), :],
                                     t_ref[pl.ds(off, CHUNK_ROWS), :])
            return c0 + s0, c1 + s1, c2 + s2

        a0, a1, a2 = lax.fori_loop(0, nfull, body, (a0, a1, a2))

    if rem:
        off = nfull * CHUNK_ROWS        # static offset, static size -> no masks
        s0, s1, s2 = _chunk_sums(x_ref[pl.ds(off, rem), :],
                                 t_ref[pl.ds(off, rem), :])
        a0, a1, a2 = a0 + s0, a1 + s1, a2 + s2

    return a0, a1, a2


def _dice_bce_partial_kernel(x_ref, t_ref, out_ref, *, block_rows, tiles_total,
                             tiles_per_split, rem_rows, has_overshoot):
    """Accumulates per-split partial sums into out_ref (block (1, 3, 8, 128)).

    out_ref[0, q] holds a (8, 128) vector accumulator for quantity q:
      q=0: sum(x * t)                         (intersection)
      q=1: sum(x + t)
      q=2: sum(t*(log_x - log_1mx) + log_1mx) (negated BCE sum; negated in wrapper)
    """
    s = pl.program_id(0)   # split (CORE_PARALLEL across TCs on 2-TC chips)
    i = pl.program_id(1)   # reduction step within the split

    @pl.when(i == 0)
    def _():
        out_ref[...] = jnp.zeros_like(out_ref)

    def accumulate(nrows):
        a0, a1, a2 = _block_sums(x_ref, t_ref, nrows)
        out_ref[0, 0] += a0
        out_ref[0, 1] += a1
        out_ref[0, 2] += a2

    ragged = rem_rows != block_rows   # trace-time: last real tile is partial

    if (not ragged) and (not has_overshoot):
        # Hot path: every grid step owns a full, fully-valid block.
        accumulate(block_rows)
    else:
        g = s * tiles_per_split + i          # global tile index (scalar)
        last = tiles_total - 1
        if ragged:
            @pl.when(g < last)
            def _():
                accumulate(block_rows)

            @pl.when(g == last)
            def _():
                accumulate(rem_rows)
            # Overshoot steps (g > last) contribute nothing.
        else:
            # Only overshoot steps exist; they re-read a clamped block and skip.
            @pl.when(g <= last)
            def _():
                accumulate(block_rows)


def _is_multi_core_tc_chip():
    """True on 2-TensorCore-per-chip generations (v7x-like)."""
    try:
        kind = jax.devices()[0].device_kind
    except Exception:
        return False
    return "v7" in str(kind).lower()


def dice_bce_loss(inputs, targets, smooth=1.0):
    """JAX/Pallas equivalent of DiceBCELoss.forward(inputs, targets, smooth).

    `inputs` must be probabilities in [0, 1] (same contract as torch BCE).
    """
    x = inputs.reshape(-1)
    t = targets.reshape(-1)
    # Keep f32/bf16 as-is (upcast happens in-register inside the kernel);
    # anything else is promoted here.
    if x.dtype not in (jnp.float32, jnp.bfloat16):
        x = x.astype(jnp.float32)
    if t.dtype not in (jnp.float32, jnp.bfloat16):
        t = t.astype(jnp.float32)
    n = x.shape[0]
    if n == 0:
        raise ValueError("dice_bce_loss: empty input (BCE mean undefined)")

    tile = SUB * LANE
    n_pad = ((n + tile - 1) // tile) * tile
    if n_pad != n:
        # Rare path (N not a multiple of 1024). Pad zeros contribute 0 to all sums.
        # TODO(synk): pad only the tail tile to avoid the full HBM copy here.
        x = jnp.pad(x, (0, n_pad - n))
        t = jnp.pad(t, (0, n_pad - n))

    rows = n_pad // LANE                      # multiple of 8
    block_rows = min(MAX_BLOCK_ROWS, rows)    # multiple of 8
    tiles_total = -(-rows // block_rows)
    rem_rows = rows - (tiles_total - 1) * block_rows   # rows in last real tile

    # Split across TensorCores only on 2-TC chips; pure overhead on v5e/v6e.
    num_splits = 2 if (_is_multi_core_tc_chip() and tiles_total >= 2) else 1
    tiles_per_split = -(-tiles_total // num_splits)
    has_overshoot = num_splits * tiles_per_split != tiles_total

    x2 = x.reshape(rows, LANE)
    t2 = t.reshape(rows, LANE)

    kernel = functools.partial(
        _dice_bce_partial_kernel,
        block_rows=block_rows,
        tiles_total=tiles_total,
        tiles_per_split=tiles_per_split,
        rem_rows=rem_rows,
        has_overshoot=has_overshoot,
    )

    if has_overshoot:
        def in_map(s, i):
            # Clamp overshooting steps onto the last valid tile; their (skipped)
            # contribution is never accumulated, so the duplicate read is benign
            # and no fully-OOB DMA is issued.
            return (jnp.minimum(s * tiles_per_split + i, tiles_total - 1), 0)
    else:
        def in_map(s, i):
            return (s * tiles_per_split + i, 0)

    if num_splits == 2:
        dims = (pltpu.CORE_PARALLEL, pltpu.ARBITRARY)
    else:
        dims = ("arbitrary", "arbitrary")

    in_bytes = n_pad * (jnp.dtype(x2.dtype).itemsize + jnp.dtype(t2.dtype).itemsize)
    cost = pl.CostEstimate(
        flops=10 * n_pad,
        transcendentals=2 * n_pad,
        bytes_accessed=in_bytes + num_splits * 3 * SUB * LANE * 4,
    )

    partials = pl.pallas_call(
        kernel,
        out_shape=jax.ShapeDtypeStruct((num_splits, 3, SUB, LANE), jnp.float32),
        grid_spec=pltpu.PrefetchScalarGridSpec(
            num_scalar_prefetch=0,
            grid=(num_splits, tiles_per_split),
            in_specs=[
                pl.BlockSpec((block_rows, LANE), in_map),
                pl.BlockSpec((block_rows, LANE), in_map),
            ],
            out_specs=pl.BlockSpec((1, 3, SUB, LANE), lambda s, i: (s, 0, 0, 0)),
        ),
        compiler_params=pltpu.CompilerParams(
            dimension_semantics=dims,
            vmem_limit_bytes=VMEM_LIMIT_BYTES,
        ),
        cost_estimate=cost,
    )(x2, t2)

    # Tiny epilogue: cross-lane / cross-split reduction + dice/BCE combine.
    sums = jnp.sum(partials, axis=(0, 2, 3))          # (3,)
    inter, xpt_sum, bce_pos_sum = sums[0], sums[1], sums[2]
    dice_loss = 1.0 - (2.0 * inter + smooth) / (xpt_sum + smooth)
    bce_mean = -bce_pos_sum / n
    return bce_mean + dice_loss


def _reference_dice_bce(inputs, targets, smooth=1.0):
    x = inputs.reshape(-1).astype(jnp.float32)
    t = targets.reshape(-1).astype(jnp.float32)
    intersection = jnp.sum(x * t)
    dice_loss = 1.0 - (2.0 * intersection + smooth) / (jnp.sum(x) + jnp.sum(t) + smooth)
    bce = jnp.mean(
        -(t * jnp.maximum(jnp.log(x), -100.0)
          + (1.0 - t) * jnp.maximum(jnp.log(1.0 - x), -100.0))
    )
    return bce + dice_loss


def _make_inputs(key, shape):
    k1, k2 = jax.random.split(key)
    # `inputs` are probabilities (binary_cross_entropy requires values in [0, 1]).
    inputs = jax.random.uniform(k1, shape, dtype=jnp.float32,
                                minval=1e-4, maxval=1.0 - 1e-4)
    targets = jax.random.bernoulli(k2, 0.5, shape).astype(jnp.float32)
    return inputs, targets


if __name__ == "__main__":
    key = jax.random.PRNGKey(0)
    loss_fn = jax.jit(dice_bce_loss)

    # 1) Small NCHW case (what the DeepLabv3+ head would produce, scaled down).
    k0, k1, k2 = jax.random.split(key, 3)
    inp_s, tgt_s = _make_inputs(k0, (2, 4, 16, 16))
    loss_s = jax.block_until_ready(loss_fn(inp_s, tgt_s))
    ref_s = _reference_dice_bce(inp_s, tgt_s)
    assert jnp.allclose(loss_s, ref_s, rtol=1e-5, atol=1e-5), (loss_s, ref_s)

    # 2) Medium case: exercises the fused chunk loop + static tail + pad path.
    inp_m, tgt_m = _make_inputs(k1, (2, 4, 40, 40))
    loss_m = jax.block_until_ready(loss_fn(inp_m, tgt_m))
    ref_m = _reference_dice_bce(inp_m, tgt_m)
    assert jnp.allclose(loss_m, ref_m, rtol=1e-5, atol=1e-5), (loss_m, ref_m)

    # 3) Larger case: exercises multi-tile pipelining + ragged last tile.
    inp_l, tgt_l = _make_inputs(k2, (2, 4, 512, 520))
    loss_l = jax.block_until_ready(loss_fn(inp_l, tgt_l))
    ref_l = _reference_dice_bce(inp_l, tgt_l)
    assert jnp.allclose(loss_l, ref_l, rtol=1e-4, atol=1e-4), (loss_l, ref_l)

    print("KERNEL_OK")
</pallas_src>

<mosaic_0001>
module attributes {stable_mosaic.version = 11 : i64} {
  func.func @_dice_bce_partial_kernel(%arg0: i32, %arg1: i32, %arg2: memref<16x128xf32, #tpu.memory_space<vmem>>, %arg3: memref<16x128xf32, #tpu.memory_space<vmem>>, %arg4: memref<1x3x8x128xf32, #tpu.memory_space<vmem>>) attributes {dimension_semantics = [#tpu.dimension_semantics<arbitrary>, #tpu.dimension_semantics<arbitrary>], iteration_bounds = array<i64: 1, 1>, scalar_prefetch = 0 : i64, scratch_operands = 0 : i64, tpu.core_type = #tpu.core_type<tc>, window_params = [{transform_indices = @transform_0, window_bounds = array<i64: 16, 128>}, {transform_indices = @transform_1, window_bounds = array<i64: 16, 128>}, {transform_indices = @transform_2, window_bounds = array<i64: 1, 3, 8, 128>}]} {
    %c0_i32 = arith.constant 0 : i32
    %0 = arith.cmpi eq, %arg1, %c0_i32 : i32
    %1 = arith.extui %0 : i1 to i32
    %c0_i32_0 = arith.constant 0 : i32
    %2 = arith.cmpi ne, %1, %c0_i32_0 : i32
    scf.if %2 {
      %cst_32 = arith.constant 0.000000e+00 : f32
      %46 = vector.broadcast %cst_32 : f32 to vector<1x3x8x128xf32>
      %c0_33 = arith.constant 0 : index
      %c0_34 = arith.constant 0 : index
      %c0_35 = arith.constant 0 : index
      %c0_36 = arith.constant 0 : index
      %47 = vector.load %arg4[%c0_33, %c0_34, %c0_35, %c0_36] : memref<1x3x8x128xf32, #tpu.memory_space<vmem>>, vector<1x3x8x128xf32>
      tpu.vector_store %arg4[%c0_33, %c0_34, %c0_35, %c0_36], %46 {strides = array<i32>} : memref<1x3x8x128xf32, #tpu.memory_space<vmem>>, vector<1x3x8x128xf32>,
    } else {
    }
    %cst = arith.constant 0.000000e+00 : f32
    %3 = vector.broadcast %cst : f32 to vector<8x128xf32>
    %c0 = arith.constant 0 : index
    %c0_1 = arith.constant 0 : index
    %4 = vector.load %arg2[%c0, %c0_1] : memref<16x128xf32, #tpu.memory_space<vmem>>, vector<16x128xf32>
    %c0_2 = arith.constant 0 : index
    %c0_3 = arith.constant 0 : index
    %5 = vector.load %arg3[%c0_2, %c0_3] : memref<16x128xf32, #tpu.memory_space<vmem>>, vector<16x128xf32>
    %6 = math.log %4 : vector<16x128xf32>
    %cst_4 = arith.constant -1.000000e+02 : f32
    %7 = vector.broadcast %cst_4 : f32 to vector<16x128xf32>
    %8 = arith.maximumf %6, %7 : vector<16x128xf32>
    %cst_5 = arith.constant 1.000000e+00 : f32
    %9 = vector.broadcast %cst_5 : f32 to vector<16x128xf32>
    %10 = arith.subf %9, %4 : vector<16x128xf32>
    %11 = math.log %10 : vector<16x128xf32>
    %cst_6 = arith.constant -1.000000e+02 : f32
    %12 = vector.broadcast %cst_6 : f32 to vector<16x128xf32>
    %13 = arith.maximumf %11, %12 : vector<16x128xf32>
    %14 = arith.subf %8, %13 : vector<16x128xf32>
    %15 = arith.mulf %5, %14 : vector<16x128xf32>
    %16 = arith.addf %15, %13 : vector<16x128xf32>
    %17 = arith.mulf %4, %5 : vector<16x128xf32>
    %18 = vector.shape_cast %17 : vector<16x128xf32> to vector<2x8x128xf32>
    %cst_7 = arith.constant dense<0.000000e+00> : vector<8x128xf32>
    %19 = vector.multi_reduction <add>, %18, %cst_7 [0] : vector<2x8x128xf32> to vector<8x128xf32>
    %20 = arith.addf %4, %5 : vector<16x128xf32>
    %21 = vector.shape_cast %20 : vector<16x128xf32> to vector<2x8x128xf32>
    %cst_8 = arith.constant dense<0.000000e+00> : vector<8x128xf32>
    %22 = vector.multi_reduction <add>, %21, %cst_8 [0] : vector<2x8x128xf32> to vector<8x128xf32>
    %23 = vector.shape_cast %16 : vector<16x128xf32> to vector<2x8x128xf32>
    %cst_9 = arith.constant dense<0.000000e+00> : vector<8x128xf32>
    %24 = vector.multi_reduction <add>, %23, %cst_9 [0] : vector<2x8x128xf32> to vector<8x128xf32>
    %25 = arith.addf %3, %19 : vector<8x128xf32>
    %26 = arith.addf %3, %22 : vector<8x128xf32>
    %27 = arith.addf %3, %24 : vector<8x128xf32>
    %c0_10 = arith.constant 0 : index
    %c0_11 = arith.constant 0 : index
    %c0_12 = arith.constant 0 : index
    %c0_13 = arith.constant 0 : index
    %28 = vector.load %arg4[%c0_10, %c0_11, %c0_12, %c0_13] : memref<1x3x8x128xf32, #tpu.memory_space<vmem>>, vector<1x1x8x128xf32>
    %29 = vector.shape_cast %28 : vector<1x1x8x128xf32> to vector<8x128xf32>
    %30 = arith.addf %29, %25 : vector<8x128xf32>
    %c0_14 = arith.constant 0 : index
    %c0_15 = arith.constant 0 : index
    %c0_16 = arith.constant 0 : index
    %c0_17 = arith.constant 0 : index
    %31 = vector.load %arg4[%c0_14, %c0_15, %c0_16, %c0_17] : memref<1x3x8x128xf32, #tpu.memory_space<vmem>>, vector<1x1x8x128xf32>
    %32 = vector.shape_cast %31 : vector<1x1x8x128xf32> to vector<8x128xf32>
    %33 = vector.shape_cast %30 : vector<8x128xf32> to vector<1x1x8x128xf32>
    tpu.vector_store %arg4[%c0_14, %c0_15, %c0_16, %c0_17], %33 {strides = array<i32>} : memref<1x3x8x128xf32, #tpu.memory_space<vmem>>, vector<1x1x8x128xf32>,
    %c0_18 = arith.constant 0 : index
    %c1 = arith.constant 1 : index
    %c0_19 = arith.constant 0 : index
    %c0_20 = arith.constant 0 : index
    %34 = vector.load %arg4[%c0_18, %c1, %c0_19, %c0_20] : memref<1x3x8x128xf32, #tpu.memory_space<vmem>>, vector<1x1x8x128xf32>
    %35 = vector.shape_cast %34 : vector<1x1x8x128xf32> to vector<8x128xf32>
    %36 = arith.addf %35, %26 : vector<8x128xf32>
    %c0_21 = arith.constant 0 : index
    %c1_22 = arith.constant 1 : index
    %c0_23 = arith.constant 0 : index
    %c0_24 = arith.constant 0 : index
    %37 = vector.load %arg4[%c0_21, %c1_22, %c0_23, %c0_24] : memref<1x3x8x128xf32, #tpu.memory_space<vmem>>, vector<1x1x8x128xf32>
    %38 = vector.shape_cast %37 : vector<1x1x8x128xf32> to vector<8x128xf32>
    %39 = vector.shape_cast %36 : vector<8x128xf32> to vector<1x1x8x128xf32>
    tpu.vector_store %arg4[%c0_21, %c1_22, %c0_23, %c0_24], %39 {strides = array<i32>} : memref<1x3x8x128xf32, #tpu.memory_space<vmem>>, vector<1x1x8x128xf32>,
    %c0_25 = arith.constant 0 : index
    %c2 = arith.constant 2 : index
    %c0_26 = arith.constant 0 : index
    %c0_27 = arith.constant 0 : index
    %40 = vector.load %arg4[%c0_25, %c2, %c0_26, %c0_27] : memref<1x3x8x128xf32, #tpu.memory_space<vmem>>, vector<1x1x8x128xf32>
    %41 = vector.shape_cast %40 : vector<1x1x8x128xf32> to vector<8x128xf32>
    %42 = arith.addf %41, %27 : vector<8x128xf32>
    %c0_28 = arith.constant 0 : index
    %c2_29 = arith.constant 2 : index
    %c0_30 = arith.constant 0 : index
    %c0_31 = arith.constant 0 : index
    %43 = vector.load %arg4[%c0_28, %c2_29, %c0_30, %c0_31] : memref<1x3x8x128xf32, #tpu.memory_space<vmem>>, vector<1x1x8x128xf32>
    %44 = vector.shape_cast %43 : vector<1x1x8x128xf32> to vector<8x128xf32>
    %45 = vector.shape_cast %42 : vector<8x128xf32> to vector<1x1x8x128xf32>
    tpu.vector_store %arg4[%c0_28, %c2_29, %c0_30, %c0_31], %45 {strides = array<i32>} : memref<1x3x8x128xf32, #tpu.memory_space<vmem>>, vector<1x1x8x128xf32>,
    return
  }
  func.func @transform_0(%arg0: i32, %arg1: i32) -> (i32, i32) {
    %c1_i32 = arith.constant 1 : i32
    %0 = arith.muli %arg0, %c1_i32 : i32
    %1 = arith.addi %0, %arg1 : i32
    %c0_i32 = arith.constant 0 : i32
    %c0_i32_0 = arith.constant 0 : i32
    return %1, %c0_i32 : i32, i32
  }
  func.func @transform_1(%arg0: i32, %arg1: i32) -> (i32, i32) {
    %c1_i32 = arith.constant 1 : i32
    %0 = arith.muli %arg0, %c1_i32 : i32
    %1 = arith.addi %0, %arg1 : i32
    %c0_i32 = arith.constant 0 : i32
    %c0_i32_0 = arith.constant 0 : i32
    return %1, %c0_i32 : i32, i32
  }
  func.func @transform_2(%arg0: i32, %arg1: i32) -> (i32, i32, i32, i32) {
    %c0_i32 = arith.constant 0 : i32
    %c0_i32_0 = arith.constant 0 : i32
    %c0_i32_1 = arith.constant 0 : i32
    %c0_i32_2 = arith.constant 0 : i32
    return %arg0, %c0_i32, %c0_i32_0, %c0_i32_1 : i32, i32, i32, i32
  }
}

</mosaic_0001>

<llo_original>
// kernel: dice_bce_loss.1
$region0: #{dice_bce_loss.1}
  #allocation0 [shape = 'u32[]', space=smem, size = 0x4, offset = 0x4, fixed_abs, tag = 'smem constant byte address 0x4 - core index']
  #allocation1 [shape = 'u32[144,128]{1,0:T(1,128)}', space=vmem, size = 0x12000, scoped, tag = 'internal scratch']
  %s0 = inlined_call_operand.vmem [shape: f32[16,128], index: 0, kind: input, shape index: {}]
  %s1 = inlined_call_operand.vmem [shape: f32[16,128], index: 1, kind: input, shape index: {}]
  %s2 = inlined_call_operand.vmem [shape: f32[1,3,8,128], index: 2, kind: output, shape index: {}]
  %s3 = sld [smem:[#allocation0]]
  $region22: #{dice_bce_loss.1} parent=0
    _
  %s5 = ssub.s32 1, %s3
  %s6 = scalar_select 0, %s5, %s3
  // Predicated region
  $region2: #{dice_bce_loss.1} parent=0 // pred_check
    _
  $region3: #{dice_bce_loss.1} parent=0 // pred_check_branch
    %8 = sbr.rel (0) target = $region5
  $region4: #{dice_bce_loss.1} parent=0 // pred_region
    %s9 = sadd.s32 0, 0
    %s10 = smul.u32 2, %s9
    %p11 = scmp.lt.s32.totalorder %s10, 1
    %s12 = scalar_select %p11, %s10, 1
    %s13 = smul.addr %s12, 8
    %s14 = scalar_lea.vmem %s0, %s13
    %s15 = sadd.s32 0, 0
    %s16 = smul.u32 2, %s15
  $region5: #{dice_bce_loss.1} parent=0 // pred_fallthru
    _
  // Predicated region
  $region6: #{dice_bce_loss.1} parent=0 // pred_check
    _
  $region7: #{dice_bce_loss.1} parent=0 // pred_check_branch
    %18 = sbr.rel (0) target = $region9
  $region8: #{dice_bce_loss.1} parent=0 // pred_region
    %s19 = sadd.s32 0, 0
    %s20 = smul.u32 2, %s19
    %p21 = scmp.lt.s32.totalorder %s20, 1
    %s22 = scalar_select %p21, %s20, 1
    %s23 = smul.addr %s22, 8
    %s24 = scalar_lea.vmem %s1, %s23
    %s25 = sadd.s32 0, 0
    %s26 = smul.u32 2, %s25
  $region9: #{dice_bce_loss.1} parent=0 // pred_fallthru
    _
  %s27 = sadd.s32 0, 0
  %s28 = smul.u32 2, %s27
  %p29 = scmp.lt.s32.totalorder %s28, 1
  %s30 = scalar_select %p29, %s28, 1
  %s31 = smul.addr %s30, 8
  %s32 = scalar_lea.vmem %s0, %s31
  %s33 = sadd.s32 0, 0
  %s34 = smul.u32 2, %s33
  %p35 = scmp.lt.s32.totalorder %s34, 1
  %s36 = scalar_select %p35, %s34, 1
  %s37 = smul.addr %s36, 8
  %s38 = scalar_lea.vmem %s1, %s37
  %s39 = sadd.s32 0, 0
  %s40 = smul.u32 2, %s39
  %p41 = scmp.lt.s32.totalorder %s40, 1
  %s42 = scalar_select %p41, %s40, 1
  %s43 = smul.addr %s42, 8
  %s44 = scalar_lea.vmem %s0, %s43
  %s45 = sadd.s32 0, 0
  %s46 = smul.u32 2, %s45
  %s47 = sadd.s32 0, 0
  %s48 = smul.u32 2, %s47
  %p49 = scmp.lt.s32.totalorder %s48, 1
  %s50 = scalar_select %p49, %s48, 1
  %s51 = smul.addr %s50, 8
  %s52 = scalar_lea.vmem %s1, %s51
  %s53 = sadd.s32 0, 0
  %s54 = smul.u32 2, %s53
  %p55 = scmp.eq.s32.totalorder 0, 0
  // Predicated region
  $region10: #{dice_bce_loss.1} parent=0 // pred_check
    %p56 = pneg %p55
  $region11: #{dice_bce_loss.1} parent=0 // pred_check_branch
    %58 = sbr.rel (%p56) target = $region13
  $region12: #{dice_bce_loss.1} parent=0 // pred_region
    %59 = vst [vmem:[%s2] sm:$0xff] 0.0
    %60 = vst [vmem:[%s2 + $0x8] sm:$0xff] 0.0
    %61 = vst [vmem:[%s2 + $0x10] sm:$0xff] 0.0
  $region13: #{dice_bce_loss.1} parent=0 // pred_fallthru
    _
  %v62 = vld [vmem:[%s44] sm:$0xff]
  %v63 = vld [vmem:[%s44 + $0x8] sm:$0xff]
  %v64 = vld [vmem:[%s52] sm:$0xff]
  %v65 = vld [vmem:[%s52 + $0x8] sm:$0xff]
  %v66 = vlog2.pop %v62
  %v67 = vmul.f32 %v66, 0.6931472
  %v68 = vlog2.pop %v63
  %v69 = vmul.f32 %v68, 0.6931472
  %v70 = vmax.f32 %v67, -100.0
  %v71 = vmax.f32 %v69, -100.0
  %v72 = vsub.f32 1.0, %v62
  %v73 = vsub.f32 1.0, %v63
  %v74 = vlog2.pop %v72
  %v75 = vmul.f32 %v74, 0.6931472
  %v76 = vlog2.pop %v73
  %v77 = vmul.f32 %v76, 0.6931472
  %v78 = vmax.f32 %v75, -100.0
  %v79 = vmax.f32 %v77, -100.0
  %v80 = vsub.f32 %v70, %v78
  %v81 = vsub.f32 %v71, %v79
  %v82 = vmul.f32 %v64, %v80
  %v83 = vmul.f32 %v65, %v81
  %v84 = vadd.f32 %v82, %v78
  %v85 = vadd.f32 %v83, %v79
  %v86 = vmul.f32 %v62, %v64
  %v87 = vmul.f32 %v63, %v65
  %v88 = vadd.f32 %v86, %v87
  %v89 = vadd.f32 %v62, %v64
  %v90 = vadd.f32 %v63, %v65
  %v91 = vadd.f32 %v89, %v90
  %v92 = vadd.f32 %v84, %v85
  %v93 = vadd.f32 %v88, 0.0
  %v94 = vadd.f32 %v91, 0.0
  %v95 = vadd.f32 %v92, 0.0
  %v96 = vld [vmem:[%s2] sm:$0xff]
  %v97 = vadd.f32 %v96, %v93
  %98 = vst [vmem:[%s2] sm:$0xff] %v97
  %s99 = scalar_lea.vmem %s2, 8
  %v100 = vld [vmem:[%s99] sm:$0xff]
  %v101 = vadd.f32 %v100, %v94
  %102 = vst [vmem:[%s99] sm:$0xff] %v101
  %s103 = scalar_lea.vmem %s2, 16
  %v104 = vld [vmem:[%s103] sm:$0xff]
  %v105 = vadd.f32 %v104, %v95
  %106 = vst [vmem:[%s103] sm:$0xff] %v105
  // Predicated region
  $region14: #{dice_bce_loss.1} parent=0 // pred_check
    _
  $region15: #{dice_bce_loss.1} parent=0 // pred_check_branch
    %108 = sbr.rel (0) target = $region17
  $region16: #{dice_bce_loss.1} parent=0 // pred_region
    _
  $region17: #{dice_bce_loss.1} parent=0 // pred_fallthru
    _
  // Predicated region
  $region18: #{dice_bce_loss.1} parent=0 // pred_check
    _
  $region19: #{dice_bce_loss.1} parent=0 // pred_check_branch
    %110 = sbr.rel (0) target = $region21
  $region20: #{dice_bce_loss.1} parent=0 // pred_region
    _
  $region21: #{dice_bce_loss.1} parent=0 // pred_fallthru
    _

</llo_original>
